<compile_context>
chip_gen: v7x
topology: tpu7x:2x2x1
jax: 0.10.0
libtpu: 0.0.40
codegen_flags: <defaults>
</compile_context>

<pallas_src>
import jax
import jax.numpy as jnp
from jax.experimental import pallas as pl
from jax.experimental.pallas import tpu as pltpu

_SUBLANE = 16       # bf16 sublane packing for the batch-tiled x
_MAX_TILE = 1024    # per-step overhead amortization; VMEM is tiny at these D/H


def _round_up(x, m):
    return ((x + m - 1) // m) * m


def critic_kernel(x_ref, w1_ref, b1_ref, w2_ref, b2_ref, w3_ref, b3_ref, q_ref):
    x = x_ref[...]  # bf16 (block_b, D) — feed MXU directly, no VPU up-cast

    # fc1 -> ReLU (bf16 operands, f32 accumulation)
    h = jnp.dot(x, w1_ref[...], preferred_element_type=jnp.float32)
    h = jnp.maximum(h + b1_ref[...], 0.0)

    # fc2 -> ReLU
    h = jnp.dot(h.astype(jnp.bfloat16), w2_ref[...],
                preferred_element_type=jnp.float32)
    h = jnp.maximum(h + b2_ref[...], 0.0)

    # fc3 (single output column): VPU multiply + lane reduce instead of an MXU
    # matmul against a zero-padded (H, 128) weight; output stays 1 lane wide.
    q = jnp.sum(h * w3_ref[...], axis=-1, keepdims=True) + b3_ref[...]

    q_ref[...] = q.astype(q_ref.dtype)


@jax.jit
def critic_forward(inputs, params):
    """inputs: (..., D) -> q: (..., 1)"""
    D = inputs.shape[-1]
    lead = inputs.shape[:-1]
    x = inputs.reshape(-1, D).astype(jnp.bfloat16)
    B = x.shape[0]
    H = params["w1"].shape[-1]

    # Adaptive batch tile: >=2 tiles whenever B permits (two v7x TensorCores),
    # capped at _MAX_TILE, multiple of 16 (bf16), ragged waste <= one group.
    num_tiles = max(pl.cdiv(B, _MAX_TILE), 2 if B >= 2 * _SUBLANE else 1)
    block_b = _round_up(pl.cdiv(B, num_tiles), _SUBLANE)
    grid = (pl.cdiv(B, block_b),)

    # Explicit VMEM budget.  Every input is double-buffered by default (even
    # constant-index weights), so count them twice.
    # TODO(synk): single-buffer the weight specs via pipeline_mode=pl.Buffered(1)
    # once that path is exercised; for now the 2x is accounted for here.
    vmem_bytes = (
        2 * block_b * D * 2              # x tiles (bf16, double-buffered)
        + 2 * block_b * 4                # q tiles (f32, double-buffered)
        + 2 * 2 * (D * H + H * H)        # w1, w2 (bf16, double-buffered)
        + 2 * 4 * (3 * H + 1)            # b1, b2, w3, b3 (f32, double-buffered)
        + 4 * block_b * H * 4            # f32 intermediates / temporaries
    )
    vmem_limit = int(min(max(2 * vmem_bytes, 16 * 2**20), 64 * 2**20))

    x_spec = pl.BlockSpec((block_b, D), lambda i: (i, 0))
    # Constant index_map: weights/biases DMA'd once, VMEM-resident across tiles.
    const = lambda shape: pl.BlockSpec(shape, lambda i: (0, 0))

    q = pl.pallas_call(
        critic_kernel,
        out_shape=jax.ShapeDtypeStruct((B, 1), jnp.float32),
        grid=grid,
        in_specs=[
            x_spec,
            const((D, H)), const((1, H)),
            const((H, H)), const((1, H)),
            const((1, H)), const((1, 1)),
        ],
        out_specs=pl.BlockSpec((block_b, 1), lambda i: (i, 0)),
        compiler_params=pltpu.CompilerParams(
            dimension_semantics=("parallel",),
            vmem_limit_bytes=vmem_limit),
    )(x, params["w1"], params["b1"], params["w2"], params["b2"],
      params["w3"], params["b3"])

    return q.reshape(lead + (1,))


def init_params(key, input_dim, critic_dim):
    """PyTorch nn.Linear default init (uniform +-1/sqrt(fan_in)).
    Weights stored pre-transposed as (in, out); w1/w2 in bf16 for the MXU,
    biases and the 1-wide fc3 row in f32. f32 masters kept for the reference."""
    ks = jax.random.split(key, 6)

    def linear(kw, kb, fan_in, fan_out):
        bound = 1.0 / jnp.sqrt(jnp.float32(fan_in))
        w = jax.random.uniform(kw, (fan_in, fan_out), jnp.float32, -bound, bound)
        b = jax.random.uniform(kb, (fan_out,), jnp.float32, -bound, bound)
        return w, b

    w1, b1 = linear(ks[0], ks[1], input_dim, critic_dim)
    w2, b2 = linear(ks[2], ks[3], critic_dim, critic_dim)
    w3, b3 = linear(ks[4], ks[5], critic_dim, 1)

    return {
        "w1": w1.astype(jnp.bfloat16), "b1": b1.reshape(1, -1),
        "w2": w2.astype(jnp.bfloat16), "b2": b2.reshape(1, -1),
        "w3": w3.reshape(1, -1),          # (1, H) f32 row for VPU mul + reduce
        "b3": b3.reshape(1, 1),
        # f32 masters for the pure-JAX reference
        "_w1_f32": w1, "_b1_f32": b1, "_w2_f32": w2, "_b2_f32": b2,
        "_w3_f32": w3, "_b3_f32": b3,
    }


def _reference(inputs, params):
    x = inputs.astype(jnp.float32)
    h = jnp.maximum(x @ params["_w1_f32"] + params["_b1_f32"], 0.0)
    h = jnp.maximum(h @ params["_w2_f32"] + params["_b2_f32"], 0.0)
    return h @ params["_w3_f32"] + params["_b3_f32"]


if __name__ == "__main__":
    B, D, H = 32, 32, 64  # batch, input_shape, critic_dim
    key = jax.random.PRNGKey(0)
    k_in, k_p = jax.random.split(key)

    inputs = jax.random.normal(k_in, (B, D), jnp.float32)
    params = init_params(k_p, D, H)

    q = critic_forward(inputs, params)
    jax.block_until_ready(q)

    assert q.shape == (B, 1)
    assert bool(jnp.all(jnp.isfinite(q)))

    # bf16 inputs/weights in the kernel vs f32 reference -> loosened tolerance.
    q_ref = _reference(inputs, params)
    assert bool(jnp.allclose(q, q_ref, atol=2e-2, rtol=2e-2)), (
        f"max abs err {float(jnp.max(jnp.abs(q - q_ref)))}")

    print("KERNEL_OK")
</pallas_src>

<mosaic_0001>
module attributes {stable_mosaic.version = 11 : i64} {
  func.func @critic_kernel(%arg0: i32, %arg1: memref<16x32xbf16, #tpu.memory_space<vmem>>, %arg2: memref<32x64xbf16, #tpu.memory_space<vmem>>, %arg3: memref<1x64xf32, #tpu.memory_space<vmem>>, %arg4: memref<64x64xbf16, #tpu.memory_space<vmem>>, %arg5: memref<1x64xf32, #tpu.memory_space<vmem>>, %arg6: memref<1x64xf32, #tpu.memory_space<vmem>>, %arg7: memref<1x1xf32, #tpu.memory_space<vmem>>, %arg8: memref<16x1xf32, #tpu.memory_space<vmem>>) attributes {dimension_semantics = [#tpu.dimension_semantics<parallel>], iteration_bounds = array<i64: 2>, scalar_prefetch = 0 : i64, scratch_operands = 0 : i64, tpu.core_type = #tpu.core_type<tc>, window_params = [{transform_indices = @transform_0, window_bounds = array<i64: 16, 32>}, {pipeline_mode = #tpu.pipeline_mode<synchronous>, transform_indices = @transform_1, window_bounds = array<i64: 32, 64>}, {pipeline_mode = #tpu.pipeline_mode<synchronous>, transform_indices = @transform_2, window_bounds = array<i64: 1, 64>}, {pipeline_mode = #tpu.pipeline_mode<synchronous>, transform_indices = @transform_3, window_bounds = array<i64: 64, 64>}, {pipeline_mode = #tpu.pipeline_mode<synchronous>, transform_indices = @transform_4, window_bounds = array<i64: 1, 64>}, {pipeline_mode = #tpu.pipeline_mode<synchronous>, transform_indices = @transform_5, window_bounds = array<i64: 1, 64>}, {pipeline_mode = #tpu.pipeline_mode<synchronous>, transform_indices = @transform_6, window_bounds = array<i64: 1, 1>}, {transform_indices = @transform_7, window_bounds = array<i64: 16, 1>}]} {
    %c0 = arith.constant 0 : index
    %c0_0 = arith.constant 0 : index
    %0 = vector.load %arg1[%c0, %c0_0] : memref<16x32xbf16, #tpu.memory_space<vmem>>, vector<16x32xbf16>
    %c0_1 = arith.constant 0 : index
    %c0_2 = arith.constant 0 : index
    %1 = vector.load %arg2[%c0_1, %c0_2] : memref<32x64xbf16, #tpu.memory_space<vmem>>, vector<32x64xbf16>
    %cst = arith.constant dense<0.000000e+00> : vector<16x64xf32>
    %2 = tpu.matmul %0, %1, %cst {dimension_numbers = #tpu.dot_dimension_numbers<[1], [0], [0], [1], [0, 0, 1, 1], [], []>} : vector<16x32xbf16>, vector<32x64xbf16>, vector<16x64xf32> -> vector<16x64xf32>
    %c0_3 = arith.constant 0 : index
    %c0_4 = arith.constant 0 : index
    %3 = vector.load %arg3[%c0_3, %c0_4] : memref<1x64xf32, #tpu.memory_space<vmem>>, vector<1x64xf32>
    %4 = vector.broadcast %3 : vector<1x64xf32> to vector<16x64xf32>
    %5 = arith.addf %2, %4 : vector<16x64xf32>
    %cst_5 = arith.constant 0.000000e+00 : f32
    %6 = vector.broadcast %cst_5 : f32 to vector<16x64xf32>
    %7 = arith.maximumf %5, %6 : vector<16x64xf32>
    %8 = arith.truncf %7 : vector<16x64xf32> to vector<16x64xbf16>
    %c0_6 = arith.constant 0 : index
    %c0_7 = arith.constant 0 : index
    %9 = vector.load %arg4[%c0_6, %c0_7] : memref<64x64xbf16, #tpu.memory_space<vmem>>, vector<64x64xbf16>
    %cst_8 = arith.constant dense<0.000000e+00> : vector<16x64xf32>
    %10 = tpu.matmul %8, %9, %cst_8 {dimension_numbers = #tpu.dot_dimension_numbers<[1], [0], [0], [1], [0, 0, 1, 1], [], []>} : vector<16x64xbf16>, vector<64x64xbf16>, vector<16x64xf32> -> vector<16x64xf32>
    %c0_9 = arith.constant 0 : index
    %c0_10 = arith.constant 0 : index
    %11 = vector.load %arg5[%c0_9, %c0_10] : memref<1x64xf32, #tpu.memory_space<vmem>>, vector<1x64xf32>
    %12 = vector.broadcast %11 : vector<1x64xf32> to vector<16x64xf32>
    %13 = arith.addf %10, %12 : vector<16x64xf32>
    %cst_11 = arith.constant 0.000000e+00 : f32
    %14 = vector.broadcast %cst_11 : f32 to vector<16x64xf32>
    %15 = arith.maximumf %13, %14 : vector<16x64xf32>
    %c0_12 = arith.constant 0 : index
    %c0_13 = arith.constant 0 : index
    %16 = vector.load %arg6[%c0_12, %c0_13] : memref<1x64xf32, #tpu.memory_space<vmem>>, vector<1x64xf32>
    %17 = vector.broadcast %16 : vector<1x64xf32> to vector<16x64xf32>
    %18 = arith.mulf %15, %17 : vector<16x64xf32>
    %cst_14 = arith.constant dense<0.000000e+00> : vector<16xf32>
    %19 = vector.multi_reduction <add>, %18, %cst_14 [1] : vector<16x64xf32> to vector<16xf32>
    %20 = vector.shape_cast %19 : vector<16xf32> to vector<16x1xf32>
    %c0_15 = arith.constant 0 : index
    %c0_16 = arith.constant 0 : index
    %21 = vector.load %arg7[%c0_15, %c0_16] : memref<1x1xf32, #tpu.memory_space<vmem>>, vector<1x1xf32>
    %22 = vector.broadcast %21 : vector<1x1xf32> to vector<16x1xf32>
    %23 = arith.addf %20, %22 : vector<16x1xf32>
    %c0_17 = arith.constant 0 : index
    %c0_18 = arith.constant 0 : index
    %24 = vector.load %arg8[%c0_17, %c0_18] : memref<16x1xf32, #tpu.memory_space<vmem>>, vector<16x1xf32>
    tpu.vector_store %arg8[%c0_17, %c0_18], %23 {strides = array<i32>} : memref<16x1xf32, #tpu.memory_space<vmem>>, vector<16x1xf32>,
    return
  }
  func.func @transform_0(%arg0: i32) -> (i32, i32) {
    %c0_i32 = arith.constant 0 : i32
    %c0_i32_0 = arith.constant 0 : i32
    return %arg0, %c0_i32 : i32, i32
  }
  func.func @transform_1(%arg0: i32) -> (i32, i32) {
    %c0_i32 = arith.constant 0 : i32
    %c0_i32_0 = arith.constant 0 : i32
    %c0_i32_1 = arith.constant 0 : i32
    return %c0_i32, %c0_i32_0 : i32, i32
  }
  func.func @transform_2(%arg0: i32) -> (i32, i32) {
    %c0_i32 = arith.constant 0 : i32
    %c0_i32_0 = arith.constant 0 : i32
    %c0_i32_1 = arith.constant 0 : i32
    return %c0_i32, %c0_i32_0 : i32, i32
  }
  func.func @transform_3(%arg0: i32) -> (i32, i32) {
    %c0_i32 = arith.constant 0 : i32
    %c0_i32_0 = arith.constant 0 : i32
    %c0_i32_1 = arith.constant 0 : i32
    return %c0_i32, %c0_i32_0 : i32, i32
  }
  func.func @transform_4(%arg0: i32) -> (i32, i32) {
    %c0_i32 = arith.constant 0 : i32
    %c0_i32_0 = arith.constant 0 : i32
    %c0_i32_1 = arith.constant 0 : i32
    return %c0_i32, %c0_i32_0 : i32, i32
  }
  func.func @transform_5(%arg0: i32) -> (i32, i32) {
    %c0_i32 = arith.constant 0 : i32
    %c0_i32_0 = arith.constant 0 : i32
    %c0_i32_1 = arith.constant 0 : i32
    return %c0_i32, %c0_i32_0 : i32, i32
  }
  func.func @transform_6(%arg0: i32) -> (i32, i32) {
    %c0_i32 = arith.constant 0 : i32
    %c0_i32_0 = arith.constant 0 : i32
    %c0_i32_1 = arith.constant 0 : i32
    return %c0_i32, %c0_i32_0 : i32, i32
  }
  func.func @transform_7(%arg0: i32) -> (i32, i32) {
    %c0_i32 = arith.constant 0 : i32
    %c0_i32_0 = arith.constant 0 : i32
    return %arg0, %c0_i32 : i32, i32
  }
}

</mosaic_0001>

<llo_original>
// kernel: critic_forward.1
$region0: #{critic_forward.1}
  #allocation0 [shape = 'u32[]', space=smem, size = 0x4, offset = 0x4, fixed_abs, tag = 'smem constant byte address 0x4 - core index']
  #allocation1 [shape = 'u32[144,128]{1,0:T(1,128)}', space=vmem, size = 0x12000, scoped, tag = 'internal scratch']
  #allocation2 [shape = 'f32[1,1]{1,0:T(1,128)S(1)}', space=vmem, size = 0x200, scoped, tag = 'scoped memory for critic_forward.1']
  %s0 = inlined_call_operand.vmem [shape: bf16[32,32], index: 0, kind: input, shape index: {}]
  %s1 = inlined_call_operand.vmem [shape: bf16[32,64], index: 1, kind: input, shape index: {}]
  %s2 = inlined_call_operand.vmem [shape: f32[1,64], index: 2, kind: input, shape index: {}]
  %s3 = inlined_call_operand.vmem [shape: bf16[64,64], index: 3, kind: input, shape index: {}]
  %s4 = inlined_call_operand.vmem [shape: f32[1,64], index: 4, kind: input, shape index: {}]
  %s5 = inlined_call_operand.vmem [shape: f32[1,64], index: 5, kind: input, shape index: {}]
  %s6 = inlined_call_operand.<no memory space> [shape: f32[1,1], index: 6, kind: input, shape index: {}]
  %s7 = inlined_call_operand.vmem [shape: f32[32,1], index: 7, kind: output, shape index: {}]
  %s8 = sld [smem:[#allocation0]]
  $region61: #{critic_forward.1} parent=0
    _
  %s10 = ssub.s32 1, %s8
  %s11 = scalar_select 0, %s10, %s8
  %v12 = vstv %s6
  %13 = vst [vmem:[#allocation2] sm:$0x1] %v12
  loop: start=0, step=1, limit=4
  $region2: #{critic_forward.1} parent=0 // loop_pre_header
    _
  $region3: #{critic_forward.1} parent=0 // loop_header
    %s15 = sphi 0, %s19
    %p16 = scmp.ge.s32.totalorder %s15, 4
    %s25 = sphi 0, %s27
    %s28 = sphi 0, %s25
    %s29 = sphi 0, %s28
    %s45 = sphi 0, %s29
    %s49 = sphi 0, %s49
    %s51 = sphi 0, %s49
    %s52 = sphi 0, %s51
    %s66 = sphi 0, %s52
    %s70 = sphi 0, %s70
    %s72 = sphi 0, %s70
    %s73 = sphi 0, %s72
    %s87 = sphi 0, %s73
    %s91 = sphi 0, %s91
    %s93 = sphi 0, %s91
    %s94 = sphi 0, %s93
    %s108 = sphi 0, %s94
    %s112 = sphi 0, %s112
    %s114 = sphi 0, %s112
    %s115 = sphi 0, %s114
    %s129 = sphi 0, %s115
    %s133 = sphi 0, %s133
    %s135 = sphi 0, %s133
    %s136 = sphi 0, %s135
    %s150 = sphi 0, %s136
    %s154 = sphi 0, %s154
    %s156 = sphi 0, %s154
    %s157 = sphi 0, %s156
    %s171 = sphi 0, %s157
    %s177 = sphi 0, %s179
    %s180 = sphi 0, %s177
    %s181 = sphi 0, %s180
    %s197 = sphi 0, %s181
  $region4: #{critic_forward.1} parent=0 // loop_header_branch
    %18 = sbr.rel (%p16) target = $region8
  $region5: #{critic_forward.1} parent=0 // loop_body
    %s20 = ssub.s32 %s15, 1
    %s21 = ssub.s32 %s15, 2
    %s22 = sadd.s32 %s15, 1
    %s23 = ssub.s32 %s15, %s22
    %p24 = scmp.eq.s32.totalorder %s23, 0
    %s26 = sadd.s32 %s25, 1
    %s27 = scalar_select %p24, %s25, %s26
    %p30 = pneg %p24
    %p31 = scmp.eq.s32.totalorder %s15, 1
    %p32 = por %p30, %p31
    %p33 = scmp.ne.s32.totalorder %s25, %s28
    %p34 = scmp.eq.s32.totalorder %s15, 0
    %p35 = por %p33, %p34
    %p36 = scmp.ne.s32.totalorder %s25, %s28
    %p37 = scmp.eq.s32.totalorder %s20, 1
    %p38 = por %p36, %p37
    %p39 = scmp.ne.s32.totalorder %s28, %s29
    %p40 = scmp.eq.s32.totalorder %s20, 0
    %p41 = por %p39, %p40
    %p42 = scmp.ne.s32.totalorder %s28, %s29
    %p43 = scmp.eq.s32.totalorder %s21, 1
    %p44 = por %p42, %p43
    %p46 = scmp.ne.s32.totalorder %s29, %s45
    %p47 = scmp.eq.s32.totalorder %s21, 0
    %p48 = por %p46, %p47
    %s50 = sadd.s32 %s49, 1
    %p53 = scmp.eq.s32.totalorder %s15, 1
    %p54 = scmp.ne.s32.totalorder %s49, %s51
    %p55 = scmp.eq.s32.totalorder %s15, 0
    %p56 = por %p54, %p55
    %p57 = scmp.ne.s32.totalorder %s49, %s51
    %p58 = scmp.eq.s32.totalorder %s20, 1
    %p59 = por %p57, %p58
    %p60 = scmp.ne.s32.totalorder %s51, %s52
    %p61 = scmp.eq.s32.totalorder %s20, 0
    %p62 = por %p60, %p61
    %p63 = scmp.ne.s32.totalorder %s51, %s52
    %p64 = scmp.eq.s32.totalorder %s21, 1
    %p65 = por %p63, %p64
    %p67 = scmp.ne.s32.totalorder %s52, %s66
    %p68 = scmp.eq.s32.totalorder %s21, 0
    %p69 = por %p67, %p68
    %s71 = sadd.s32 %s70, 1
    %p74 = scmp.eq.s32.totalorder %s15, 1
    %p75 = scmp.ne.s32.totalorder %s70, %s72
    %p76 = scmp.eq.s32.totalorder %s15, 0
    %p77 = por %p75, %p76
    %p78 = scmp.ne.s32.totalorder %s70, %s72
    %p79 = scmp.eq.s32.totalorder %s20, 1
    %p80 = por %p78, %p79
    %p81 = scmp.ne.s32.totalorder %s72, %s73
    %p82 = scmp.eq.s32.totalorder %s20, 0
    %p83 = por %p81, %p82
    %p84 = scmp.ne.s32.totalorder %s72, %s73
    %p85 = scmp.eq.s32.totalorder %s21, 1
    %p86 = por %p84, %p85
    %p88 = scmp.ne.s32.totalorder %s73, %s87
    %p89 = scmp.eq.s32.totalorder %s21, 0
    %p90 = por %p88, %p89
    %s92 = sadd.s32 %s91, 1
    %p95 = scmp.eq.s32.totalorder %s15, 1
    %p96 = scmp.ne.s32.totalorder %s91, %s93
    %p97 = scmp.eq.s32.totalorder %s15, 0
    %p98 = por %p96, %p97
    %p99 = scmp.ne.s32.totalorder %s91, %s93
    %p100 = scmp.eq.s32.totalorder %s20, 1
    %p101 = por %p99, %p100
    %p102 = scmp.ne.s32.totalorder %s93, %s94
    %p103 = scmp.eq.s32.totalorder %s20, 0
    %p104 = por %p102, %p103
    %p105 = scmp.ne.s32.totalorder %s93, %s94
    %p106 = scmp.eq.s32.totalorder %s21, 1
    %p107 = por %p105, %p106
    %p109 = scmp.ne.s32.totalorder %s94, %s108
    %p110 = scmp.eq.s32.totalorder %s21, 0
    %p111 = por %p109, %p110
    %s113 = sadd.s32 %s112, 1
    %p116 = scmp.eq.s32.totalorder %s15, 1
    %p117 = scmp.ne.s32.totalorder %s112, %s114
    %p118 = scmp.eq.s32.totalorder %s15, 0
    %p119 = por %p117, %p118
    %p120 = scmp.ne.s32.totalorder %s112, %s114
    %p121 = scmp.eq.s32.totalorder %s20, 1
    %p122 = por %p120, %p121
    %p123 = scmp.ne.s32.totalorder %s114, %s115
    %p124 = scmp.eq.s32.totalorder %s20, 0
    %p125 = por %p123, %p124
    %p126 = scmp.ne.s32.totalorder %s114, %s115
    %p127 = scmp.eq.s32.totalorder %s21, 1
    %p128 = por %p126, %p127
    %p130 = scmp.ne.s32.totalorder %s115, %s129
    %p131 = scmp.eq.s32.totalorder %s21, 0
    %p132 = por %p130, %p131
    %s134 = sadd.s32 %s133, 1
    %p137 = scmp.eq.s32.totalorder %s15, 1
    %p138 = scmp.ne.s32.totalorder %s133, %s135
    %p139 = scmp.eq.s32.totalorder %s15, 0
    %p140 = por %p138, %p139
    %p141 = scmp.ne.s32.totalorder %s133, %s135
    %p142 = scmp.eq.s32.totalorder %s20, 1
    %p143 = por %p141, %p142
    %p144 = scmp.ne.s32.totalorder %s135, %s136
    %p145 = scmp.eq.s32.totalorder %s20, 0
    %p146 = por %p144, %p145
    %p147 = scmp.ne.s32.totalorder %s135, %s136
    %p148 = scmp.eq.s32.totalorder %s21, 1
    %p149 = por %p147, %p148
    %p151 = scmp.ne.s32.totalorder %s136, %s150
    %p152 = scmp.eq.s32.totalorder %s21, 0
    %p153 = por %p151, %p152
    %s155 = sadd.s32 %s154, 1
    %p158 = scmp.eq.s32.totalorder %s15, 1
    %p159 = scmp.ne.s32.totalorder %s154, %s156
    %p160 = scmp.eq.s32.totalorder %s15, 0
    %p161 = por %p159, %p160
    %p162 = scmp.ne.s32.totalorder %s154, %s156
    %p163 = scmp.eq.s32.totalorder %s20, 1
    %p164 = por %p162, %p163
    %p165 = scmp.ne.s32.totalorder %s156, %s157
    %p166 = scmp.eq.s32.totalorder %s20, 0
    %p167 = por %p165, %p166
    %p168 = scmp.ne.s32.totalorder %s156, %s157
    %p169 = scmp.eq.s32.totalorder %s21, 1
    %p170 = por %p168, %p169
    %p172 = scmp.ne.s32.totalorder %s157, %s171
    %p173 = scmp.eq.s32.totalorder %s21, 0
    %p174 = por %p172, %p173
    %s175 = ssub.s32 %s15, %s22
    %p176 = scmp.eq.s32.totalorder %s175, 0
    %s178 = sadd.s32 %s177, 1
    %s179 = scalar_select %p176, %s177, %s178
    %p182 = pneg %p176
    %p183 = scmp.eq.s32.totalorder %s15, 1
    %p184 = por %p182, %p183
    %p185 = scmp.ne.s32.totalorder %s177, %s180
    %p186 = scmp.eq.s32.totalorder %s15, 0
    %p187 = por %p185, %p186
    %p188 = scmp.ne.s32.totalorder %s177, %s180
    %p189 = scmp.eq.s32.totalorder %s20, 1
    %p190 = por %p188, %p189
    %p191 = scmp.ne.s32.totalorder %s180, %s181
    %p192 = scmp.eq.s32.totalorder %s20, 0
    %p193 = por %p191, %p192
    %p194 = scmp.ne.s32.totalorder %s180, %s181
    %p195 = scmp.eq.s32.totalorder %s21, 1
    %p196 = por %p194, %p195
    %p198 = scmp.ne.s32.totalorder %s181, %s197
    %p199 = scmp.eq.s32.totalorder %s21, 0
    %p200 = por %p198, %p199
    %p201 = scmp.le.s32.totalorder 1, %s15
    %p202 = scmp.lt.s32.totalorder %s15, 3
    %p203 = pnand %p201, %p202
    %p204 = pneg %p203
    // Predicated region
    $region9: #{critic_forward.1} parent=5 // pred_check
      _
    $region10: #{critic_forward.1} parent=5 // pred_check_branch
      %206 = sbr.rel (%p203) target = $region12
    $region11: #{critic_forward.1} parent=5 // pred_region
      %s207 = ssub.s32 %s15, 1
      // Predicated region
      $region13: #{critic_forward.1} parent=11 // pred_check
        %p208 = pneg %p62
      $region14: #{critic_forward.1} parent=11 // pred_check_branch
        %210 = sbr.rel (%p208) target = $region16
      $region15: #{critic_forward.1} parent=11 // pred_region
        _
      $region16: #{critic_forward.1} parent=11 // pred_fallthru
        _
      // Predicated region
      $region17: #{critic_forward.1} parent=11 // pred_check
        %p211 = pneg %p83
      $region18: #{critic_forward.1} parent=11 // pred_check_branch
        %213 = sbr.rel (%p211) target = $region20
      $region19: #{critic_forward.1} parent=11 // pred_region
        _
      $region20: #{critic_forward.1} parent=11 // pred_fallthru
        _
      // Predicated region
      $region21: #{critic_forward.1} parent=11 // pred_check
        %p214 = pneg %p104
      $region22: #{critic_forward.1} parent=11 // pred_check_branch
        %216 = sbr.rel (%p214) target = $region24
      $region23: #{critic_forward.1} parent=11 // pred_region
        _
      $region24: #{critic_forward.1} parent=11 // pred_fallthru
        _
      // Predicated region
      $region25: #{critic_forward.1} parent=11 // pred_check
        %p217 = pneg %p125
      $region26: #{critic_forward.1} parent=11 // pred_check_branch
        %219 = sbr.rel (%p217) target = $region28
      $region27: #{critic_forward.1} parent=11 // pred_region
        _
      $region28: #{critic_forward.1} parent=11 // pred_fallthru
        _
      // Predicated region
      $region29: #{critic_forward.1} parent=11 // pred_check
        %p220 = pneg %p146
      $region30: #{critic_forward.1} parent=11 // pred_check_branch
        %222 = sbr.rel (%p220) target = $region32
      $region31: #{critic_forward.1} parent=11 // pred_region
        _
      $region32: #{critic_forward.1} parent=11 // pred_fallthru
        _
      // Predicated region
      $region33: #{critic_forward.1} parent=11 // pred_check
        %p223 = pneg %p167
      $region34: #{critic_forward.1} parent=11 // pred_check_branch
        %225 = sbr.rel (%p223) target = $region36
      $region35: #{critic_forward.1} parent=11 // pred_region
        _
      $region36: #{critic_forward.1} parent=11 // pred_fallthru
        _
    $region12: #{critic_forward.1} parent=5 // pred_fallthru
      _
    %p226 = scmp.lt.s32.totalorder %s15, 2
    // Predicated region
    $region37: #{critic_forward.1} parent=5 // pred_check
      %p227 = pneg %p226
    $region38: #{critic_forward.1} parent=5 // pred_check_branch
      %229 = sbr.rel (%p227) target = $region40
    $region39: #{critic_forward.1} parent=5 // pred_region
      // Predicated region
      $region41: #{critic_forward.1} parent=39 // pred_check
        %p230 = pneg %p35
      $region42: #{critic_forward.1} parent=39 // pred_check_branch
        %232 = sbr.rel (%p230) target = $region44
      $region43: #{critic_forward.1} parent=39 // pred_region
        %s233 = smul.u32 2, %s15
        %p234 = scmp.lt.s32.totalorder %s233, 3
        %s235 = scalar_select %p234, %s233, 3
        %s236 = smul.addr %s235, 4
        %s237 = scalar_lea.vmem %s0, %s236
        %s238 = smul.u32 2, %s15
      $region44: #{critic_forward.1} parent=39 // pred_fallthru
        _
    $region40: #{critic_forward.1} parent=5 // pred_fallthru
      _
    %p239 = scmp.le.s32.totalorder 1, %s15
    %p240 = scmp.lt.s32.totalorder %s15, 3
    %p241 = pnand %p239, %p240
    %p242 = pneg %p241
    // Predicated region
    $region45: #{critic_forward.1} parent=5 // pred_check
      _
    $region46: #{critic_forward.1} parent=5 // pred_check_branch
      %244 = sbr.rel (%p241) target = $region48
    $region47: #{critic_forward.1} parent=5 // pred_region
      %s245 = ssub.s32 %s15, 1
      %s246 = smul.u32 2, %s20
      %p247 = scmp.lt.s32.totalorder %s246, 3
      %s248 = scalar_select %p247, %s246, 3
      %s249 = smul.addr %s248, 4
      %s250 = scalar_lea.vmem %s0, %s249
      %p251 = pneg %p41
      %p252 = pneg %p38
      %p253 = pneg %p62
      %p254 = pneg %p59
      %p255 = pneg %p83
      %p256 = pneg %p80
      %p257 = pneg %p104
      %p258 = pneg %p101
      %p259 = pneg %p125
      %p260 = pneg %p122
      %p261 = pneg %p146
      %p262 = pneg %p143
      %p263 = pneg %p167
      %p264 = pneg %p164
      %p265 = pneg %p193
      %p266 = pneg %p190
      %s267 = smul.u32 2, %s20
      %p268 = scmp.lt.s32.totalorder %s267, 3
      %s269 = scalar_select %p268, %s267, 3
      %s270 = smul.addr %s269, 8
      %s271 = scalar_lea.vmem %s7, %s270
      %s272 = smul.u32 2, %s20
      %p273 = scmp.lt.s32.totalorder %s272, 3
      %s274 = scalar_select %p273, %s272, 3
      %s275 = smul.addr %s274, 4
      %s276 = scalar_lea.vmem %s0, %s275
      %s277 = smul.u32 2, %s20
      %s278 = smul.u32 2, %s20
      %p279 = scmp.lt.s32.totalorder %s278, 3
      %s280 = scalar_select %p279, %s278, 3
      %s281 = smul.addr %s280, 8
      %s282 = scalar_lea.vmem %s7, %s281
      %s283 = smul.u32 2, %s20
      %v285 = vld [vmem:[%s276] sm:$0xf]
      %v286 = vld [vmem:[%s276 + $0x4] sm:$0xf]
      %v287 = vld [vmem:[%s1] sm:$0xf]
      %v288 = vld [vmem:[%s1 + $0x4] sm:$0xf]
      %v289 = vld [vmem:[%s1 + $0x8] sm:$0xf]
      %v290 = vld [vmem:[%s1 + $0xc] sm:$0xf]
      %v291 = vld [vmem:[%s2] sm:$0x1]
      %v293 = vlaneseq
      %v294 = vshrl.u32 %v293, 7
      %v295 = vsub.s32 0, %v294
      %v296 = vrot.slane %v291, %v295
      %v300 = vunpack.c.l.b16 %v285
      %v301 = vunpack.c.l.b16 %v286
      %v302 = vpack.c.b16 %v301, %v300
      %v307 = vunpack.c.l.b16 %v287
      %v308 = vunpack.c.l.b16 %v288
      %v309 = vunpack.c.l.b16 %v289
      %v310 = vunpack.c.l.b16 %v290
      %v311 = vpack.c.b16 %v308, %v307
      %v312 = vpack.c.b16 %v310, %v309
      %vm315 = vcmask 261120
      %v317 = vsel %vm315, %v302, 0
      %319 = vmatprep.subr.bf16.mxu0 0
      %320 = vmatpush1.bf16.msra.mxu0 %v311
      %321 = vmatprep.subr.bf16.mxu0 0
      %322 = vmatpush1.bf16.msra.mxu0 %v312
      %323 = vmatprep.subr.bf16.mxu0 0
      %324 = vmatpush1.bf16.msra.mxu0 0
      %325 = vmatprep.subr.bf16.mxu0 0
      %326 = vmatpush1.bf16.msra.mxu0 0
      %327 = vmatprep.subr.bf16.mxu0 0
      %328 = vmatpush1.bf16.msra.mxu0 0
      %329 = vmatprep.subr.bf16.mxu0 0
      %330 = vmatpush1.bf16.msra.mxu0 0
      %331 = vmatprep.subr.bf16.mxu0 0
      %332 = vmatpush1.bf16.msra.mxu0 0
      %333 = vmatprep.subr.bf16.mxu0 0
      %334 = vmatpush1.bf16.msra.mxu0 0
      %335 = vmatprep.subr.bf16.mxu0 0
      %336 = vmatpush1.bf16.msra.mxu0 0
      %337 = vmatprep.subr.bf16.mxu0 0
      %338 = vmatpush1.bf16.msra.mxu0 0
      %339 = vmatprep.subr.bf16.mxu0 0
      %340 = vmatpush1.bf16.msra.mxu0 0
      %341 = vmatprep.subr.bf16.mxu0 0
      %342 = vmatpush1.bf16.msra.mxu0 0
      %343 = vmatprep.subr.bf16.mxu0 0
      %344 = vmatpush1.bf16.msra.mxu0 0
      %345 = vmatprep.subr.bf16.mxu0 0
      %346 = vmatpush1.bf16.msra.mxu0 0
      %347 = vmatprep.subr.bf16.mxu0 0
      %348 = vmatpush1.bf16.msra.mxu0 0
      %349 = vmatprep.subr.bf16.mxu0 0
      %350 = vmatpush1.bf16.msra.mxu0 0
      %351 = vmatprep.mubr.bf16.mxu0 0
      %352 = vmatmul.mubr.bf16.gmra.mrb[0].mxu0 %v317
      %v353 = vpop.f32.mrb[0].mxu0
      %v354 = vadd.f32 %v296, %v353
      %v355 = vpop.f32.mrb[0].mxu0
      %v356 = vpop.f32.mrb[0].mxu0
      %v357 = vadd.f32 %v296, %v356
      %v358 = vpop.f32.mrb[0].mxu0
      %359 = vdwg.mxu0
      %v360 = vmax.f32 %v354, 0.0
      %v361 = vmax.f32 %v357, 0.0
      %v362 = vpack.c.bf16 %v361, %v360
      %v363 = vld [vmem:[%s3] sm:$0xf]
      %v364 = vld [vmem:[%s3 + $0x4] sm:$0xf]
      %v365 = vld [vmem:[%s3 + $0x8] sm:$0xf]
      %v366 = vld [vmem:[%s3 + $0xc] sm:$0xf]
      %v367 = vld [vmem:[%s3 + $0x10] sm:$0xf]
      %v368 = vld [vmem:[%s3 + $0x14] sm:$0xf]
      %v369 = vld [vmem:[%s3 + $0x18] sm:$0xf]
      %v370 = vld [vmem:[%s3 + $0x1c] sm:$0xf]
      %v371 = vld [vmem:[%s4] sm:$0x1]
      %v373 = vlaneseq
      %v374 = vshrl.u32 %v373, 7
      %v375 = vsub.s32 0, %v374
      %v376 = vrot.slane %v371, %v375
      %v386 = vunpack.c.l.b16 %v363
      %v387 = vunpack.c.l.b16 %v364
      %v388 = vunpack.c.l.b16 %v365
      %v389 = vunpack.c.l.b16 %v366
      %v390 = vunpack.c.l.b16 %v367
      %v391 = vunpack.c.l.b16 %v368
      %v392 = vunpack.c.l.b16 %v369
      %v393 = vunpack.c.l.b16 %v370
      %v394 = vpack.c.b16 %v387, %v386
      %v395 = vpack.c.b16 %v389, %v388
      %v396 = vpack.c.b16 %v391, %v390
      %v397 = vpack.c.b16 %v393, %v392
      %vm402 = vcmask 523264
      %v404 = vsel %vm402, %v362, 0
      %406 = vmatprep.subr.bf16.mxu0 0
      %407 = vmatpush1.bf16.msra.mxu0 %v394
      %408 = vmatprep.subr.bf16.mxu0 0
      %409 = vmatpush1.bf16.msra.mxu0 %v395
      %410 = vmatprep.subr.bf16.mxu0 0
      %411 = vmatpush1.bf16.msra.mxu0 %v396
      %412 = vmatprep.subr.bf16.mxu0 0
      %413 = vmatpush1.bf16.msra.mxu0 %v397
      %414 = vmatprep.subr.bf16.mxu0 0
      %415 = vmatpush1.bf16.msra.mxu0 0
      %416 = vmatprep.subr.bf16.mxu0 0
      %417 = vmatpush1.bf16.msra.mxu0 0
      %418 = vmatprep.subr.bf16.mxu0 0
      %419 = vmatpush1.bf16.msra.mxu0 0
      %420 = vmatprep.subr.bf16.mxu0 0
      %421 = vmatpush1.bf16.msra.mxu0 0
      %422 = vmatprep.subr.bf16.mxu0 0
      %423 = vmatpush1.bf16.msra.mxu0 0
      %424 = vmatprep.subr.bf16.mxu0 0
      %425 = vmatpush1.bf16.msra.mxu0 0
      %426 = vmatprep.subr.bf16.mxu0 0
      %427 = vmatpush1.bf16.msra.mxu0 0
      %428 = vmatprep.subr.bf16.mxu0 0
      %429 = vmatpush1.bf16.msra.mxu0 0
      %430 = vmatprep.subr.bf16.mxu0 0
      %431 = vmatpush1.bf16.msra.mxu0 0
      %432 = vmatprep.subr.bf16.mxu0 0
      %433 = vmatpush1.bf16.msra.mxu0 0
      %434 = vmatprep.subr.bf16.mxu0 0
      %435 = vmatpush1.bf16.msra.mxu0 0
      %436 = vmatprep.subr.bf16.mxu0 0
      %437 = vmatpush1.bf16.msra.mxu0 0
      %438 = vmatprep.mubr.bf16.mxu0 0
      %439 = vmatmul.mubr.bf16.gmra.mrb[0].mxu0 %v404
      %v440 = vpop.f32.mrb[0].mxu0
      %v441 = vadd.f32 %v376, %v440
      %v442 = vpop.f32.mrb[0].mxu0
      %v443 = vpop.f32.mrb[0].mxu0
      %v444 = vadd.f32 %v376, %v443
      %v445 = vpop.f32.mrb[0].mxu0
      %446 = vdwg.mxu0
      %v447 = vmax.f32 %v441, 0.0
      %v448 = vmax.f32 %v444, 0.0
      %v449 = vld [vmem:[%s5] sm:$0x1]
      %v451 = vlaneseq
      %v452 = vshrl.u32 %v451, 7
      %v453 = vsub.s32 0, %v452
      %v454 = vrot.slane %v449, %v453
      %v456 = vmul.f32 %v447, %v454
      %v457 = vmul.f32 %v448, %v454
      %v458 = vsel %vm402, %v456, 0.0
      %459 = vadd.xlane.f32.xlu0 %v458
      %v460 = vpop.xlane.xlu0 %459
      %v461 = vsel %vm402, %v457, 0.0
      %462 = vadd.xlane.f32.xlu0 %v461
      %v463 = vpop.xlane.xlu0 %462
      %v464 = vld [vmem:[#allocation2] sm:$0x1]
      %v466 = vlaneseq
      %v467 = vshrl.u32 %v466, 7
      %v468 = vsub.s32 0, %v467
      %v469 = vrot.slane %v464, %v468
      %v471 = vadd.f32 %v460, %v469
      %v472 = vadd.f32 %v463, %v469
      %vm473 = vcmask 7168
      %474 = vst.msk [vmem:[%s282] sm:$0xff] %vm473, %v471
      %475 = vst.msk [vmem:[%s282 + $0x8] sm:$0xff] %vm473, %v472
      %s476 = smul.u32 2, %s20
      %p477 = scmp.lt.s32.totalorder %s476, 3
      %s478 = scalar_select %p477, %s476, 3
      %s479 = smul.addr %s478, 8
      %s480 = scalar_lea.vmem %s7, %s479
      // Predicated region
      $region49: #{critic_forward.1} parent=47 // pred_check
        %p481 = pneg %p190
      $region50: #{critic_forward.1} parent=47 // pred_check_branch
        %483 = sbr.rel (%p481) target = $region52
      $region51: #{critic_forward.1} parent=47 // pred_region
        %s484 = smul.u32 2, %s20
      $region52: #{critic_forward.1} parent=47 // pred_fallthru
        _
    $region48: #{critic_forward.1} parent=5 // pred_fallthru
      _
    %p485 = scmp.le.s32.totalorder 2, %s15
    // Predicated region
    $region53: #{critic_forward.1} parent=5 // pred_check
      %p486 = pneg %p485
    $region54: #{critic_forward.1} parent=5 // pred_check_branch
      %488 = sbr.rel (%p486) target = $region56
    $region55: #{critic_forward.1} parent=5 // pred_region
      %s489 = ssub.s32 %s15, 2
      // Predicated region
      $region57: #{critic_forward.1} parent=55 // pred_check
        %p490 = pneg %p196
      $region58: #{critic_forward.1} parent=55 // pred_check_branch
        %492 = sbr.rel (%p490) target = $region60
      $region59: #{critic_forward.1} parent=55 // pred_region
        %s493 = smul.u32 2, %s21
        %p494 = scmp.lt.s32.totalorder %s493, 3
        %s495 = scalar_select %p494, %s493, 3
        %s496 = smul.addr %s495, 8
        %s497 = scalar_lea.vmem %s7, %s496
      $region60: #{critic_forward.1} parent=55 // pred_fallthru
        _
    $region56: #{critic_forward.1} parent=5 // pred_fallthru
      _
  $region6: #{critic_forward.1} parent=0 // loop_footer
    %s19 = sadd.s32 1, %s15
  $region7: #{critic_forward.1} parent=0 // loop_footer_branch
    %14 = sbr.rel target = $region3
  $region8: #{critic_forward.1} parent=0 // loop_exit
    _

</llo_original>
